<compile_context>
chip_gen: v5e
topology: v5e:2x2
jax: 0.10.0
libtpu: 0.0.40
codegen_flags: <defaults>
</compile_context>

<pallas_src>
import functools

import jax
import jax.numpy as jnp
from jax.experimental import pallas as pl
from jax.experimental.pallas import tpu as pltpu


# -----------------------------------------------------------------------------
# VMEM budgeting / row-tile selection
# -----------------------------------------------------------------------------
def _vmem_limit_bytes():
    """Scoped-VMEM limit per chip generation (headroom kept below physical)."""
    cap = 128 << 20
    try:
        cap = int(getattr(pltpu.get_tpu_info(), "vmem_capacity_bytes", cap))
    except Exception:
        pass
    # v5e/v6e (128 MiB phys) -> 100 MiB; v7x (64 MiB phys) -> 48 MiB.
    return max(32 << 20, min(cap - (16 << 20), 100 << 20))


def _estimate_step_vmem(th, W, C, K, out_itemsize):
    f32 = 4
    io = 2 * (th * W * C * f32 + 2 * W * C * f32 + th * W * C * out_itemsize)  # dbl-buffered tiles
    wts = 2 * ((9 + 2) * C * f32 + K * C * 2)                                  # dbl-buffered weights
    interm = 4 * (th + 2) * W * C * f32 + th * W * K * 2 + 2 * th * W * C * f32
    return io + wts + interm


def _pick_row_tile(H, W, C, K, out_itemsize, budget_bytes):
    best = 1
    for th in range(1, H + 1):
        if H % th == 0 and _estimate_step_vmem(th, W, C, K, out_itemsize) <= budget_bytes:
            best = th
    return best


# -----------------------------------------------------------------------------
# Fused kernel: depthwise3x3 + ReLU + 1x1 GEMM (+ fused 1x1 shortcut) + add + ReLU
# -----------------------------------------------------------------------------
def _res_conv_kernel(xt_ref, xm_ref, xb_ref, wdw_ref, bdw_ref, wmx_ref, b_ref, o_ref,
                     *, TH, W, C, has_conv0, use_bf16):
    r = pl.program_id(1)
    nrt = pl.num_programs(1)

    # ---- gather the (TH+2)-row strip with a zero halo at the image border ----
    mid = xm_ref[0]                                            # (TH, W, C) f32
    top = jnp.where(r > 0, xt_ref[0, 0], 0.0)                  # row r*TH - 1 (or zeros)
    bot = jnp.where(r < nrt - 1, xb_ref[0, 0], 0.0)            # row r*TH + TH (or zeros)
    xs = jnp.concatenate([top[None], mid, bot[None]], axis=0)  # (TH+2, W, C)

    # ---- dx shifts on the XLU (2 rolls) + edge masks; dy shifts are aligned
    #      slices along the (non-tiled) H axis ---------------------------------
    col = jax.lax.broadcasted_iota(jnp.int32, (1, W, 1), 1)
    xs_m1 = jnp.where(col > 0, pltpu.roll(xs, shift=1, axis=1), 0.0)         # x[.., w-1, :]
    xs_p1 = jnp.where(col < W - 1, pltpu.roll(xs, shift=W - 1, axis=1), 0.0)  # x[.., w+1, :]
    shifted = (xs_m1, xs, xs_p1)                               # indexed by dx

    # ---- depthwise 3x3 (VPU, f32): 9 multiply-accumulates --------------------
    wdw = wdw_ref[...]                                         # (9, C), loaded once
    acc = None
    for dy in range(3):
        for dx in range(3):
            tap = shifted[dx][dy:dy + TH]                      # (TH, W, C)
            term = tap * wdw[dy * 3 + dx].reshape(1, 1, C)
            acc = term if acc is None else acc + term
    h = jnp.maximum(acc + bdw_ref[0].reshape(1, 1, C), 0.0)    # dw + bias + ReLU (f32)

    # ---- 1x1 conv(s) on the MXU: one GEMM; K-concat fuses the conv_0 branch --
    mxu_dtype = jnp.bfloat16 if use_bf16 else jnp.float32
    h2 = h.reshape(TH * W, C).astype(mxu_dtype)
    x2 = mid.reshape(TH * W, C)                                # f32 center tile
    if has_conv0:
        lhs = jnp.concatenate([h2, x2.astype(mxu_dtype)], axis=-1)   # (TH*W, 2C)
        y = jnp.dot(lhs, wmx_ref[...], preferred_element_type=jnp.float32)
        out = y + b_ref[...]                                   # bias = pw_b + conv0_b
    else:
        y = jnp.dot(h2, wmx_ref[...], preferred_element_type=jnp.float32)
        out = x2 + y + b_ref[...]                              # identity shortcut stays f32

    # ---- final ReLU + store ----------------------------------------------------
    o_ref[0] = jnp.maximum(out, 0.0).reshape(TH, W, C).astype(o_ref.dtype)


# -----------------------------------------------------------------------------
# Wrapper: NHWC in / NHWC out, real channel count in HBM (no padding, no transposes)
# -----------------------------------------------------------------------------
def res_conv_forward(params, x, *, use_bf16=True, out_dtype=None, row_tile=None):
    B, H, W, C = x.shape
    out_c = params["dw_w"].shape[0]
    # conv_1's first conv takes out_c channels and is applied to x directly in the
    # PyTorch module, so x must carry out_c channels.
    assert C == out_c, "res_conv.conv_1 requires x to have out_c channels"
    has_conv0 = params.get("conv0_w", None) is not None
    if has_conv0:
        assert params["conv0_w"].shape[1] == C
    out_dtype = x.dtype if out_dtype is None else jnp.dtype(out_dtype)
    mxu_dtype = jnp.bfloat16 if use_bf16 else jnp.float32

    # Weights -> kernel layouts (channel-last).
    wdw = jnp.transpose(params["dw_w"][:, 0], (1, 2, 0)).reshape(9, C)   # tap dy*3+dx
    bdw = params["dw_b"].reshape(1, C).astype(jnp.float32)
    wpw = params["pw_w"][:, :, 0, 0].T.astype(mxu_dtype)                 # (C_in, C_out)
    bias = params["pw_b"].reshape(1, C).astype(jnp.float32)
    if has_conv0:
        w0 = params["conv0_w"][:, :, 0, 0].T.astype(mxu_dtype)
        wmx = jnp.concatenate([wpw, w0], axis=0)                         # (2C, C)
        bias = bias + params["conv0_b"].reshape(1, C)
    else:
        wmx = wpw
    K = wmx.shape[0]

    # Row tiling sized to the per-generation VMEM budget.
    vmem_limit = _vmem_limit_bytes()
    TH = _pick_row_tile(H, W, C, K, out_dtype.itemsize, vmem_limit // 2) \
        if row_tile is None else row_tile
    assert H % TH == 0, "row_tile must divide H"
    NR = H // TH
    # NOTE: keep W a multiple of 8 so the (TH*W, C) reshapes are layout-free.

    grid = (B, NR)
    in_specs = [
        # halo row above / TH-row tile / halo row below (clamped index maps).
        pl.BlockSpec((1, 1, W, C), lambda b, r: (b, jnp.maximum(r * TH - 1, 0), 0, 0)),
        pl.BlockSpec((1, TH, W, C), lambda b, r: (b, r, 0, 0)),
        pl.BlockSpec((1, 1, W, C), lambda b, r: (b, jnp.minimum(r * TH + TH, H - 1), 0, 0)),
        # grid-invariant weights / biases.
        pl.BlockSpec((9, C), lambda b, r: (0, 0)),
        pl.BlockSpec((1, C), lambda b, r: (0, 0)),
        pl.BlockSpec((K, C), lambda b, r: (0, 0)),
        pl.BlockSpec((1, C), lambda b, r: (0, 0)),
    ]
    out_specs = pl.BlockSpec((1, TH, W, C), lambda b, r: (b, r, 0, 0))

    flops = 2 * 9 * B * H * W * C + 2 * B * H * W * C * K
    bytes_accessed = (B * (H + 2 * NR) * W * C * x.dtype.itemsize
                      + int(wdw.size + bdw.size + bias.size) * 4
                      + int(wmx.size) * jnp.dtype(mxu_dtype).itemsize
                      + B * H * W * C * out_dtype.itemsize)

    return pl.pallas_call(
        functools.partial(_res_conv_kernel, TH=TH, W=W, C=C,
                          has_conv0=has_conv0, use_bf16=use_bf16),
        out_shape=jax.ShapeDtypeStruct((B, H, W, C), out_dtype),
        grid=grid,
        in_specs=in_specs,
        out_specs=out_specs,
        compiler_params=pltpu.CompilerParams(
            dimension_semantics=("parallel", "parallel"),
            vmem_limit_bytes=int(vmem_limit)),
        cost_estimate=pl.CostEstimate(flops=int(flops), transcendentals=0,
                                      bytes_accessed=int(bytes_accessed)),
    )(x, x, x, wdw, bdw, wmx, bias)


def res_conv_forward_nchw(params, x_nchw, **kw):
    """PyTorch-layout adapter (adds two layout transposes — prefer NHWC end-to-end)."""
    y = res_conv_forward(params, jnp.transpose(x_nchw, (0, 2, 3, 1)), **kw)
    return jnp.transpose(y, (0, 3, 1, 2))


# -----------------------------------------------------------------------------
# Pure-JAX reference (NCHW, test-only) and parameter init
# -----------------------------------------------------------------------------
def res_conv_reference(params, x):
    dn = ("NCHW", "OIHW", "NCHW")

    def conv(t, w, b, groups=1, pad=0):
        y = jax.lax.conv_general_dilated(
            t, w, (1, 1), [(pad, pad), (pad, pad)],
            dimension_numbers=dn, feature_group_count=groups)
        return y + b.reshape(1, -1, 1, 1)

    out_c = params["dw_w"].shape[0]
    right = conv(x, params["dw_w"], params["dw_b"], groups=out_c, pad=1)
    right = jax.nn.relu(right)
    right = conv(right, params["pw_w"], params["pw_b"])
    if params.get("conv0_w", None) is None:
        left = x
    else:
        left = conv(x, params["conv0_w"], params["conv0_b"])
    return jax.nn.relu(left + right)


def _conv_init(key, o, i, kh, kw):
    k1, k2 = jax.random.split(key)
    bound = 1.0 / float(i * kh * kw) ** 0.5
    w = jax.random.uniform(k1, (o, i, kh, kw), jnp.float32, -bound, bound)
    b = jax.random.uniform(k2, (o,), jnp.float32, -bound, bound)
    return w, b


def init_res_conv_params(key, in_c, out_c):
    k0, k1, k2 = jax.random.split(key, 3)
    p = {"conv0_w": None, "conv0_b": None}
    if in_c != out_c:
        p["conv0_w"], p["conv0_b"] = _conv_init(k0, out_c, in_c, 1, 1)
    p["dw_w"], p["dw_b"] = _conv_init(k1, out_c, 1, 3, 3)       # depthwise, fan_in = 9
    p["pw_w"], p["pw_b"] = _conv_init(k2, out_c, out_c, 1, 1)
    return p


# -----------------------------------------------------------------------------
if __name__ == "__main__":
    B, C, H, W = 2, 32, 16, 16
    key = jax.random.PRNGKey(0)
    kx, kp, kp2, kw0, kb0 = jax.random.split(key, 5)
    x = jax.random.normal(kx, (B, H, W, C), jnp.float32)        # NHWC, kernel-native
    x_nchw = jnp.transpose(x, (0, 3, 1, 2))                     # for the reference only

    # Case 1: in_c == out_c (conv_0 is None); 8-row tiles exercise the halo logic.
    params = init_res_conv_params(kp, C, C)
    fwd = jax.jit(functools.partial(res_conv_forward, use_bf16=True, row_tile=8))
    out = jax.block_until_ready(fwd(params, x))
    ref = jnp.transpose(res_conv_reference(params, x_nchw), (0, 2, 3, 1))
    assert out.shape == (B, H, W, C)
    assert jnp.allclose(out, ref, atol=5e-2, rtol=5e-2), float(jnp.max(jnp.abs(out - ref)))

    # Case 2: fused conv_0 path (single K-concat GEMM) + bf16 output + auto row tile.
    # (The PyTorch forward applies conv_1 to x directly, so the conv_0 branch is only
    #  shape-consistent when in_c == out_c; params built at in_c == out_c purely to
    #  cover that kernel path.)
    params2 = init_res_conv_params(kp2, C, C)
    bound = 1.0 / float(C) ** 0.5
    params2["conv0_w"] = jax.random.uniform(kw0, (C, C, 1, 1), jnp.float32, -bound, bound)
    params2["conv0_b"] = jax.random.uniform(kb0, (C,), jnp.float32, -bound, bound)
    fwd2 = jax.jit(functools.partial(res_conv_forward, use_bf16=True,
                                     out_dtype=jnp.bfloat16))
    out2 = jax.block_until_ready(fwd2(params2, x))
    ref2 = jnp.transpose(res_conv_reference(params2, x_nchw), (0, 2, 3, 1))
    assert jnp.allclose(out2.astype(jnp.float32), ref2, atol=1e-1, rtol=5e-2), \
        float(jnp.max(jnp.abs(out2.astype(jnp.float32) - ref2)))

    print("KERNEL_OK")
</pallas_src>

<mosaic_0001>
module attributes {stable_mosaic.version = 11 : i64} {
  func.func @_res_conv_kernel(%arg0: i32, %arg1: i32, %arg2: memref<1x1x16x32xf32, #tpu.memory_space<vmem>>, %arg3: memref<1x8x16x32xf32, #tpu.memory_space<vmem>>, %arg4: memref<1x1x16x32xf32, #tpu.memory_space<vmem>>, %arg5: memref<9x32xf32, #tpu.memory_space<vmem>>, %arg6: memref<1x32xf32, #tpu.memory_space<vmem>>, %arg7: memref<32x32xbf16, #tpu.memory_space<vmem>>, %arg8: memref<1x32xf32, #tpu.memory_space<vmem>>, %arg9: memref<1x8x16x32xf32, #tpu.memory_space<vmem>>) attributes {dimension_semantics = [#tpu.dimension_semantics<parallel>, #tpu.dimension_semantics<parallel>], iteration_bounds = array<i64: 2, 2>, scalar_prefetch = 0 : i64, scratch_operands = 0 : i64, tpu.core_type = #tpu.core_type<tc>, window_params = [{transform_indices = @transform_0, window_bounds = array<i64: 1, 1, 16, 32>}, {transform_indices = @transform_1, window_bounds = array<i64: 1, 8, 16, 32>}, {transform_indices = @transform_2, window_bounds = array<i64: 1, 1, 16, 32>}, {pipeline_mode = #tpu.pipeline_mode<synchronous>, transform_indices = @transform_3, window_bounds = array<i64: 9, 32>}, {pipeline_mode = #tpu.pipeline_mode<synchronous>, transform_indices = @transform_4, window_bounds = array<i64: 1, 32>}, {pipeline_mode = #tpu.pipeline_mode<synchronous>, transform_indices = @transform_5, window_bounds = array<i64: 32, 32>}, {pipeline_mode = #tpu.pipeline_mode<synchronous>, transform_indices = @transform_6, window_bounds = array<i64: 1, 32>}, {transform_indices = @transform_7, window_bounds = array<i64: 1, 8, 16, 32>}]} {
    %c0 = arith.constant 0 : index
    %c0_0 = arith.constant 0 : index
    %c0_1 = arith.constant 0 : index
    %c0_2 = arith.constant 0 : index
    %0 = vector.load %arg3[%c0, %c0_0, %c0_1, %c0_2] : memref<1x8x16x32xf32, #tpu.memory_space<vmem>>, vector<1x8x16x32xf32>
    %1 = vector.shape_cast %0 : vector<1x8x16x32xf32> to vector<8x16x32xf32>
    %c0_i32 = arith.constant 0 : i32
    %2 = arith.cmpi sgt, %arg1, %c0_i32 : i32
    %c0_3 = arith.constant 0 : index
    %c0_4 = arith.constant 0 : index
    %c0_5 = arith.constant 0 : index
    %c0_6 = arith.constant 0 : index
    %3 = vector.load %arg2[%c0_3, %c0_4, %c0_5, %c0_6] : memref<1x1x16x32xf32, #tpu.memory_space<vmem>>, vector<1x1x16x32xf32>
    %4 = vector.shape_cast %3 : vector<1x1x16x32xf32> to vector<16x32xf32>
    %cst = arith.constant 0.000000e+00 : f32
    %5 = vector.broadcast %cst : f32 to vector<16x32xf32>
    %6 = arith.select %2, %4, %5 : vector<16x32xf32>
    %c1_i32 = arith.constant 1 : i32
    %7 = arith.cmpi slt, %arg1, %c1_i32 : i32
    %c0_7 = arith.constant 0 : index
    %c0_8 = arith.constant 0 : index
    %c0_9 = arith.constant 0 : index
    %c0_10 = arith.constant 0 : index
    %8 = vector.load %arg4[%c0_7, %c0_8, %c0_9, %c0_10] : memref<1x1x16x32xf32, #tpu.memory_space<vmem>>, vector<1x1x16x32xf32>
    %9 = vector.shape_cast %8 : vector<1x1x16x32xf32> to vector<16x32xf32>
    %cst_11 = arith.constant 0.000000e+00 : f32
    %10 = vector.broadcast %cst_11 : f32 to vector<16x32xf32>
    %11 = arith.select %7, %9, %10 : vector<16x32xf32>
    %12 = vector.shape_cast %6 : vector<16x32xf32> to vector<1x16x32xf32>
    %13 = vector.shape_cast %11 : vector<16x32xf32> to vector<1x16x32xf32>
    %14 = tpu.concatenate %12, %1, %13 in 0 : vector<1x16x32xf32>, vector<8x16x32xf32>, vector<1x16x32xf32> -> vector<10x16x32xf32>
    %15 = tpu.iota {dimensions = array<i32: 1>} : vector<1x16x1xi32>
    %c0_i32_12 = arith.constant 0 : i32
    %16 = vector.broadcast %c0_i32_12 : i32 to vector<1x16x1xi32>
    %17 = arith.cmpi sgt, %15, %16 : vector<1x16x1xi32>
    %c1_i32_13 = arith.constant 1 : i32
    %18 = tpu.dynamic_rotate %14 by %c1_i32_13 dim 1 : vector<10x16x32xf32>, i32 -> vector<10x16x32xf32>
    %cst_14 = arith.constant 0.000000e+00 : f32
    %19 = vector.shape_cast %17 : vector<1x16x1xi1> to vector<1x16x1xi1>
    %20 = vector.broadcast %19 : vector<1x16x1xi1> to vector<10x16x32xi1>
    %21 = vector.broadcast %cst_14 : f32 to vector<10x16x32xf32>
    %22 = arith.select %20, %18, %21 : vector<10x16x32xi1>, vector<10x16x32xf32>
    %c15_i32 = arith.constant 15 : i32
    %23 = vector.broadcast %c15_i32 : i32 to vector<1x16x1xi32>
    %24 = arith.cmpi slt, %15, %23 : vector<1x16x1xi32>
    %c15_i32_15 = arith.constant 15 : i32
    %25 = tpu.dynamic_rotate %14 by %c15_i32_15 dim 1 : vector<10x16x32xf32>, i32 -> vector<10x16x32xf32>
    %cst_16 = arith.constant 0.000000e+00 : f32
    %26 = vector.shape_cast %24 : vector<1x16x1xi1> to vector<1x16x1xi1>
    %27 = vector.broadcast %26 : vector<1x16x1xi1> to vector<10x16x32xi1>
    %28 = vector.broadcast %cst_16 : f32 to vector<10x16x32xf32>
    %29 = arith.select %27, %25, %28 : vector<10x16x32xi1>, vector<10x16x32xf32>
    %c0_17 = arith.constant 0 : index
    %c0_18 = arith.constant 0 : index
    %30 = vector.load %arg5[%c0_17, %c0_18] : memref<9x32xf32, #tpu.memory_space<vmem>>, vector<9x32xf32>
    %31 = vector.extract_strided_slice %22 {offsets = [0, 0, 0], sizes = [8, 16, 32], strides = [1, 1, 1]} : vector<10x16x32xf32> to vector<8x16x32xf32>
    %32 = vector.extract_strided_slice %30 {offsets = [0, 0], sizes = [1, 32], strides = [1, 1]} : vector<9x32xf32> to vector<1x32xf32>
    %33 = vector.shape_cast %32 : vector<1x32xf32> to vector<32xf32>
    %34 = vector.shape_cast %33 : vector<32xf32> to vector<1x1x32xf32>
    %35 = vector.broadcast %34 : vector<1x1x32xf32> to vector<8x16x32xf32>
    %36 = arith.mulf %31, %35 : vector<8x16x32xf32>
    %37 = vector.extract_strided_slice %14 {offsets = [0, 0, 0], sizes = [8, 16, 32], strides = [1, 1, 1]} : vector<10x16x32xf32> to vector<8x16x32xf32>
    %38 = vector.extract_strided_slice %30 {offsets = [1, 0], sizes = [1, 32], strides = [1, 1]} : vector<9x32xf32> to vector<1x32xf32>
    %39 = vector.shape_cast %38 : vector<1x32xf32> to vector<32xf32>
    %40 = vector.shape_cast %39 : vector<32xf32> to vector<1x1x32xf32>
    %41 = vector.broadcast %40 : vector<1x1x32xf32> to vector<8x16x32xf32>
    %42 = arith.mulf %37, %41 : vector<8x16x32xf32>
    %43 = arith.addf %36, %42 : vector<8x16x32xf32>
    %44 = vector.extract_strided_slice %29 {offsets = [0, 0, 0], sizes = [8, 16, 32], strides = [1, 1, 1]} : vector<10x16x32xf32> to vector<8x16x32xf32>
    %45 = vector.extract_strided_slice %30 {offsets = [2, 0], sizes = [1, 32], strides = [1, 1]} : vector<9x32xf32> to vector<1x32xf32>
    %46 = vector.shape_cast %45 : vector<1x32xf32> to vector<32xf32>
    %47 = vector.shape_cast %46 : vector<32xf32> to vector<1x1x32xf32>
    %48 = vector.broadcast %47 : vector<1x1x32xf32> to vector<8x16x32xf32>
    %49 = arith.mulf %44, %48 : vector<8x16x32xf32>
    %50 = arith.addf %43, %49 : vector<8x16x32xf32>
    %51 = vector.extract_strided_slice %22 {offsets = [1, 0, 0], sizes = [8, 16, 32], strides = [1, 1, 1]} : vector<10x16x32xf32> to vector<8x16x32xf32>
    %52 = vector.extract_strided_slice %30 {offsets = [3, 0], sizes = [1, 32], strides = [1, 1]} : vector<9x32xf32> to vector<1x32xf32>
    %53 = vector.shape_cast %52 : vector<1x32xf32> to vector<32xf32>
    %54 = vector.shape_cast %53 : vector<32xf32> to vector<1x1x32xf32>
    %55 = vector.broadcast %54 : vector<1x1x32xf32> to vector<8x16x32xf32>
    %56 = arith.mulf %51, %55 : vector<8x16x32xf32>
    %57 = arith.addf %50, %56 : vector<8x16x32xf32>
    %58 = vector.extract_strided_slice %14 {offsets = [1, 0, 0], sizes = [8, 16, 32], strides = [1, 1, 1]} : vector<10x16x32xf32> to vector<8x16x32xf32>
    %59 = vector.extract_strided_slice %30 {offsets = [4, 0], sizes = [1, 32], strides = [1, 1]} : vector<9x32xf32> to vector<1x32xf32>
    %60 = vector.shape_cast %59 : vector<1x32xf32> to vector<32xf32>
    %61 = vector.shape_cast %60 : vector<32xf32> to vector<1x1x32xf32>
    %62 = vector.broadcast %61 : vector<1x1x32xf32> to vector<8x16x32xf32>
    %63 = arith.mulf %58, %62 : vector<8x16x32xf32>
    %64 = arith.addf %57, %63 : vector<8x16x32xf32>
    %65 = vector.extract_strided_slice %29 {offsets = [1, 0, 0], sizes = [8, 16, 32], strides = [1, 1, 1]} : vector<10x16x32xf32> to vector<8x16x32xf32>
    %66 = vector.extract_strided_slice %30 {offsets = [5, 0], sizes = [1, 32], strides = [1, 1]} : vector<9x32xf32> to vector<1x32xf32>
    %67 = vector.shape_cast %66 : vector<1x32xf32> to vector<32xf32>
    %68 = vector.shape_cast %67 : vector<32xf32> to vector<1x1x32xf32>
    %69 = vector.broadcast %68 : vector<1x1x32xf32> to vector<8x16x32xf32>
    %70 = arith.mulf %65, %69 : vector<8x16x32xf32>
    %71 = arith.addf %64, %70 : vector<8x16x32xf32>
    %72 = vector.extract_strided_slice %22 {offsets = [2, 0, 0], sizes = [8, 16, 32], strides = [1, 1, 1]} : vector<10x16x32xf32> to vector<8x16x32xf32>
    %73 = vector.extract_strided_slice %30 {offsets = [6, 0], sizes = [1, 32], strides = [1, 1]} : vector<9x32xf32> to vector<1x32xf32>
    %74 = vector.shape_cast %73 : vector<1x32xf32> to vector<32xf32>
    %75 = vector.shape_cast %74 : vector<32xf32> to vector<1x1x32xf32>
    %76 = vector.broadcast %75 : vector<1x1x32xf32> to vector<8x16x32xf32>
    %77 = arith.mulf %72, %76 : vector<8x16x32xf32>
    %78 = arith.addf %71, %77 : vector<8x16x32xf32>
    %79 = vector.extract_strided_slice %14 {offsets = [2, 0, 0], sizes = [8, 16, 32], strides = [1, 1, 1]} : vector<10x16x32xf32> to vector<8x16x32xf32>
    %80 = vector.extract_strided_slice %30 {offsets = [7, 0], sizes = [1, 32], strides = [1, 1]} : vector<9x32xf32> to vector<1x32xf32>
    %81 = vector.shape_cast %80 : vector<1x32xf32> to vector<32xf32>
    %82 = vector.shape_cast %81 : vector<32xf32> to vector<1x1x32xf32>
    %83 = vector.broadcast %82 : vector<1x1x32xf32> to vector<8x16x32xf32>
    %84 = arith.mulf %79, %83 : vector<8x16x32xf32>
    %85 = arith.addf %78, %84 : vector<8x16x32xf32>
    %86 = vector.extract_strided_slice %29 {offsets = [2, 0, 0], sizes = [8, 16, 32], strides = [1, 1, 1]} : vector<10x16x32xf32> to vector<8x16x32xf32>
    %87 = vector.extract_strided_slice %30 {offsets = [8, 0], sizes = [1, 32], strides = [1, 1]} : vector<9x32xf32> to vector<1x32xf32>
    %88 = vector.shape_cast %87 : vector<1x32xf32> to vector<32xf32>
    %89 = vector.shape_cast %88 : vector<32xf32> to vector<1x1x32xf32>
    %90 = vector.broadcast %89 : vector<1x1x32xf32> to vector<8x16x32xf32>
    %91 = arith.mulf %86, %90 : vector<8x16x32xf32>
    %92 = arith.addf %85, %91 : vector<8x16x32xf32>
    %c0_19 = arith.constant 0 : index
    %c0_20 = arith.constant 0 : index
    %93 = vector.load %arg6[%c0_19, %c0_20] : memref<1x32xf32, #tpu.memory_space<vmem>>, vector<1x32xf32>
    %94 = vector.shape_cast %93 : vector<1x32xf32> to vector<32xf32>
    %95 = vector.shape_cast %94 : vector<32xf32> to vector<1x1x32xf32>
    %96 = vector.broadcast %95 : vector<1x1x32xf32> to vector<8x16x32xf32>
    %97 = arith.addf %92, %96 : vector<8x16x32xf32>
    %cst_21 = arith.constant 0.000000e+00 : f32
    %98 = vector.broadcast %cst_21 : f32 to vector<8x16x32xf32>
    %99 = arith.maximumf %97, %98 : vector<8x16x32xf32>
    %100 = vector.shape_cast %99 : vector<8x16x32xf32> to vector<128x32xf32>
    %101 = arith.truncf %100 : vector<128x32xf32> to vector<128x32xbf16>
    %102 = vector.shape_cast %1 : vector<8x16x32xf32> to vector<128x32xf32>
    %c0_22 = arith.constant 0 : index
    %c0_23 = arith.constant 0 : index
    %103 = vector.load %arg7[%c0_22, %c0_23] : memref<32x32xbf16, #tpu.memory_space<vmem>>, vector<32x32xbf16>
    %cst_24 = arith.constant dense<0.000000e+00> : vector<128x32xf32>
    %104 = tpu.matmul %101, %103, %cst_24 {dimension_numbers = #tpu.dot_dimension_numbers<[1], [0], [0], [1], [0, 0, 1, 1], [], []>} : vector<128x32xbf16>, vector<32x32xbf16>, vector<128x32xf32> -> vector<128x32xf32>
    %105 = arith.addf %102, %104 : vector<128x32xf32>
    %c0_25 = arith.constant 0 : index
    %c0_26 = arith.constant 0 : index
    %106 = vector.load %arg8[%c0_25, %c0_26] : memref<1x32xf32, #tpu.memory_space<vmem>>, vector<1x32xf32>
    %107 = vector.broadcast %106 : vector<1x32xf32> to vector<128x32xf32>
    %108 = arith.addf %105, %107 : vector<128x32xf32>
    %cst_27 = arith.constant 0.000000e+00 : f32
    %109 = vector.broadcast %cst_27 : f32 to vector<128x32xf32>
    %110 = arith.maximumf %108, %109 : vector<128x32xf32>
    %111 = vector.shape_cast %110 : vector<128x32xf32> to vector<8x16x32xf32>
    %c0_28 = arith.constant 0 : index
    %c0_29 = arith.constant 0 : index
    %c0_30 = arith.constant 0 : index
    %c0_31 = arith.constant 0 : index
    %112 = vector.load %arg9[%c0_28, %c0_29, %c0_30, %c0_31] : memref<1x8x16x32xf32, #tpu.memory_space<vmem>>, vector<1x8x16x32xf32>
    %113 = vector.shape_cast %112 : vector<1x8x16x32xf32> to vector<8x16x32xf32>
    %114 = vector.shape_cast %111 : vector<8x16x32xf32> to vector<1x8x16x32xf32>
    tpu.vector_store %arg9[%c0_28, %c0_29, %c0_30, %c0_31], %114 {strides = array<i32>} : memref<1x8x16x32xf32, #tpu.memory_space<vmem>>, vector<1x8x16x32xf32>,
    return
  }
  func.func @transform_0(%arg0: i32, %arg1: i32) -> (i32, i32, i32, i32) {
    %c8_i32 = arith.constant 8 : i32
    %0 = arith.muli %arg1, %c8_i32 : i32
    %c1_i32 = arith.constant 1 : i32
    %1 = arith.subi %0, %c1_i32 : i32
    %c0_i32 = arith.constant 0 : i32
    %2 = arith.maxsi %1, %c0_i32 : i32
    %c0_i32_0 = arith.constant 0 : i32
    %c0_i32_1 = arith.constant 0 : i32
    %c0_i32_2 = arith.constant 0 : i32
    return %arg0, %2, %c0_i32_0, %c0_i32_1 : i32, i32, i32, i32
  }
  func.func @transform_1(%arg0: i32, %arg1: i32) -> (i32, i32, i32, i32) {
    %c0_i32 = arith.constant 0 : i32
    %c0_i32_0 = arith.constant 0 : i32
    %c0_i32_1 = arith.constant 0 : i32
    return %arg0, %arg1, %c0_i32, %c0_i32_0 : i32, i32, i32, i32
  }
  func.func @transform_2(%arg0: i32, %arg1: i32) -> (i32, i32, i32, i32) {
    %c8_i32 = arith.constant 8 : i32
    %0 = arith.muli %arg1, %c8_i32 : i32
    %c8_i32_0 = arith.constant 8 : i32
    %1 = arith.addi %0, %c8_i32_0 : i32
    %c15_i32 = arith.constant 15 : i32
    %2 = arith.minsi %1, %c15_i32 : i32
    %c0_i32 = arith.constant 0 : i32
    %c0_i32_1 = arith.constant 0 : i32
    %c0_i32_2 = arith.constant 0 : i32
    return %arg0, %2, %c0_i32, %c0_i32_1 : i32, i32, i32, i32
  }
  func.func @transform_3(%arg0: i32, %arg1: i32) -> (i32, i32) {
    %c0_i32 = arith.constant 0 : i32
    %c0_i32_0 = arith.constant 0 : i32
    %c0_i32_1 = arith.constant 0 : i32
    return %c0_i32, %c0_i32_0 : i32, i32
  }
  func.func @transform_4(%arg0: i32, %arg1: i32) -> (i32, i32) {
    %c0_i32 = arith.constant 0 : i32
    %c0_i32_0 = arith.constant 0 : i32
    %c0_i32_1 = arith.constant 0 : i32
    return %c0_i32, %c0_i32_0 : i32, i32
  }
  func.func @transform_5(%arg0: i32, %arg1: i32) -> (i32, i32) {
    %c0_i32 = arith.constant 0 : i32
    %c0_i32_0 = arith.constant 0 : i32
    %c0_i32_1 = arith.constant 0 : i32
    return %c0_i32, %c0_i32_0 : i32, i32
  }
  func.func @transform_6(%arg0: i32, %arg1: i32) -> (i32, i32) {
    %c0_i32 = arith.constant 0 : i32
    %c0_i32_0 = arith.constant 0 : i32
    %c0_i32_1 = arith.constant 0 : i32
    return %c0_i32, %c0_i32_0 : i32, i32
  }
  func.func @transform_7(%arg0: i32, %arg1: i32) -> (i32, i32, i32, i32) {
    %c0_i32 = arith.constant 0 : i32
    %c0_i32_0 = arith.constant 0 : i32
    %c0_i32_1 = arith.constant 0 : i32
    return %arg0, %arg1, %c0_i32, %c0_i32_0 : i32, i32, i32, i32
  }
}

</mosaic_0001>

<llo_original>
// kernel: res_conv_forward.1
$region0: #{res_conv_forward.1}
  #allocation0 [shape = 'u32[]', space=smem, size = 0x4, offset = 0x4, fixed_abs, tag = 'smem constant byte address 0x4 - core index']
  #allocation1 [shape = 'u32[72,128]{1,0:T(1,128)}', space=vmem, size = 0x9000, scoped, tag = 'internal scratch']
  %s0 = inlined_call_operand.hbm [shape: f32[2,16,16,32], index: 0, kind: input, shape index: {}, may-alias: {0,1,2}]
  %s1 = inlined_call_operand.hbm [shape: f32[2,16,16,32], index: 1, kind: input, shape index: {}, may-alias: {0,1,2}]
  %s2 = inlined_call_operand.hbm [shape: f32[2,16,16,32], index: 2, kind: input, shape index: {}, may-alias: {0,1,2}]
  %s3 = inlined_call_operand.vmem [shape: f32[9,32], index: 3, kind: input, shape index: {}]
  %s4 = inlined_call_operand.vmem [shape: f32[1,32], index: 4, kind: input, shape index: {}]
  %s5 = inlined_call_operand.vmem [shape: bf16[32,32], index: 5, kind: input, shape index: {}]
  %s6 = inlined_call_operand.vmem [shape: f32[1,32], index: 6, kind: input, shape index: {}]
  %s7 = inlined_call_operand.hbm [shape: f32[2,16,16,32], index: 7, kind: output, shape index: {}]
  %s8 = sld [smem:[#allocation0]]
  $region73: #{res_conv_forward.1} parent=0
    _
  %s10 = ssub.s32 1, %s8
  %s11 = scalar_select 0, %s10, %s8
  $region1: #{res_conv_forward.1} parent=0
    #allocation2 [shape = 'u8[16384]{0}', space=vmem, size = 0x4000, scoped, tag = 'input window, operand 0']
    #allocation3 [shape = 's32[2]{0}', space=sflag, size = 0x8, scoped, tag = 'scoped memory for res_conv_forward.1']
    #allocation4 [shape = 's32[2]{0}', space=sflag, size = 0x8, scoped, tag = 'scoped memory for res_conv_forward.1']
    #allocation5 [shape = 'u8[131072]{0}', space=vmem, size = 0x20000, scoped, tag = 'input window, operand 1']
    #allocation6 [shape = 's32[2]{0}', space=sflag, size = 0x8, scoped, tag = 'scoped memory for res_conv_forward.1']
    #allocation7 [shape = 'u8[16384]{0}', space=vmem, size = 0x4000, scoped, tag = 'input window, operand 2']
    #allocation8 [shape = 'u8[131072]{0}', space=vmem, size = 0x20000, scoped, tag = 'output window, operand 0']
    %12 = vsyncpa [#allocation3], 0
    %s13 = scalar_lea.sflag [#allocation3], 1
    %14 = vsyncpa %s13, 0
    %15 = vsyncpa [#allocation6], 0
    %s16 = scalar_lea.sflag [#allocation6], 1
    %17 = vsyncpa %s16, 0
    %18 = vsyncpa [#allocation4], 0
    %s19 = scalar_lea.sflag [#allocation4], 1
    %20 = vsyncpa %s19, 0
    loop: start=0, step=1, limit=6
    $region2: #{res_conv_forward.1} parent=1 // loop_pre_header
      _
    $region3: #{res_conv_forward.1} parent=1 // loop_header
      %s22 = sphi 0, %s26
      %p23 = scmp.ge.s32.totalorder %s22, 6
      %s29 = sphi 0, %s41
      %s30 = sphi 0, %s37
      %s31 = sphi 0, %s29
      %s32 = sphi 0, %s30
      %s33 = sphi 0, %s31
      %s34 = sphi 0, %s32
      %s54 = sphi 0, %s56
      %s57 = sphi 0, %s54
      %s58 = sphi 0, %s57
      %s74 = sphi 0, %s58
      %s82 = sphi 0, %s84
      %s85 = sphi 0, %s82
      %s86 = sphi 0, %s85
      %s102 = sphi 0, %s86
      %s118 = sphi 0, %s120
      %s121 = sphi 0, %s118
      %s122 = sphi 0, %s121
      %s138 = sphi 0, %s122
      %s142 = sphi 0, %s142
      %s144 = sphi 0, %s142
      %s145 = sphi 0, %s144
      %s159 = sphi 0, %s145
      %s163 = sphi 0, %s163
      %s165 = sphi 0, %s163
      %s166 = sphi 0, %s165
      %s180 = sphi 0, %s166
      %s184 = sphi 0, %s184
      %s186 = sphi 0, %s184
      %s187 = sphi 0, %s186
      %s201 = sphi 0, %s187
      %s205 = sphi 0, %s205
      %s207 = sphi 0, %s205
      %s208 = sphi 0, %s207
      %s222 = sphi 0, %s208
      %s230 = sphi 0, %s232
      %s233 = sphi 0, %s230
      %s234 = sphi 0, %s233
      %s250 = sphi 0, %s234
    $region4: #{res_conv_forward.1} parent=1 // loop_header_branch
      %25 = sbr.rel (%p23) target = $region8
    $region5: #{res_conv_forward.1} parent=1 // loop_body
      %s27 = ssub.s32 %s22, 1
      %s28 = ssub.s32 %s22, 2
      %s35 = sadd.s32 1, %s30
      %p36 = scmp.ge.s32.totalorder %s35, 2
      %s37 = scalar_select %p36, 0, %s35
      %s38 = sadd.s32 1, %s29
      %s39 = scalar_select %p36, %s38, %s29
      %p40 = scmp.ge.s32.totalorder %s39, 2
      %s41 = scalar_select %p40, 0, %s39
      %s42 = smul.u32 %s30, 8
      %s43 = ssub.s32 %s42, 1
      %p44 = scmp.gt.s32.totalorder %s43, 0
      %s45 = scalar_select %p44, %s43, 0
      %s46 = smul.u32 %s37, 8
      %s47 = ssub.s32 %s46, 1
      %p48 = scmp.gt.s32.totalorder %s47, 0
      %s49 = scalar_select %p48, %s47, 0
      %s50 = ssub.s32 %s29, %s41
      %s51 = ssub.s32 %s45, %s49
      %s52 = sor.u32 %s50, %s51
      %p53 = scmp.eq.s32.totalorder %s52, 0
      %s55 = sadd.s32 %s54, 1
      %s56 = scalar_select %p53, %s54, %s55
      %p59 = pneg %p53
      %p60 = scmp.eq.s32.totalorder %s22, 3
      %p61 = por %p59, %p60
      %p62 = scmp.ne.s32.totalorder %s54, %s57
      %p63 = scmp.eq.s32.totalorder %s22, 0
      %p64 = por %p62, %p63
      %p65 = scmp.ne.s32.totalorder %s54, %s57
      %p66 = scmp.eq.s32.totalorder %s27, 3
      %p67 = por %p65, %p66
      %p68 = scmp.ne.s32.totalorder %s57, %s58
      %p69 = scmp.eq.s32.totalorder %s27, 0
      %p70 = por %p68, %p69
      %p71 = scmp.ne.s32.totalorder %s57, %s58
      %p72 = scmp.eq.s32.totalorder %s28, 3
      %p73 = por %p71, %p72
      %p75 = scmp.ne.s32.totalorder %s58, %s74
      %p76 = scmp.eq.s32.totalorder %s28, 0
      %p77 = por %p75, %p76
      %s78 = ssub.s32 %s29, %s41
      %s79 = ssub.s32 %s30, %s37
      %s80 = sor.u32 %s78, %s79
      %p81 = scmp.eq.s32.totalorder %s80, 0
      %s83 = sadd.s32 %s82, 1
      %s84 = scalar_select %p81, %s82, %s83
      %p87 = pneg %p81
      %p88 = scmp.eq.s32.totalorder %s22, 3
      %p89 = por %p87, %p88
      %p90 = scmp.ne.s32.totalorder %s82, %s85
      %p91 = scmp.eq.s32.totalorder %s22, 0
      %p92 = por %p90, %p91
      %p93 = scmp.ne.s32.totalorder %s82, %s85
      %p94 = scmp.eq.s32.totalorder %s27, 3
      %p95 = por %p93, %p94
      %p96 = scmp.ne.s32.totalorder %s85, %s86
      %p97 = scmp.eq.s32.totalorder %s27, 0
      %p98 = por %p96, %p97
      %p99 = scmp.ne.s32.totalorder %s85, %s86
      %p100 = scmp.eq.s32.totalorder %s28, 3
      %p101 = por %p99, %p100
      %p103 = scmp.ne.s32.totalorder %s86, %s102
      %p104 = scmp.eq.s32.totalorder %s28, 0
      %p105 = por %p103, %p104
      %s106 = smul.u32 %s30, 8
      %s107 = sadd.s32 %s106, 8
      %p108 = scmp.lt.s32.totalorder %s107, 15
      %s109 = scalar_select %p108, %s107, 15
      %s110 = smul.u32 %s37, 8
      %s111 = sadd.s32 %s110, 8
      %p112 = scmp.lt.s32.totalorder %s111, 15
      %s113 = scalar_select %p112, %s111, 15
      %s114 = ssub.s32 %s29, %s41
      %s115 = ssub.s32 %s109, %s113
      %s116 = sor.u32 %s114, %s115
      %p117 = scmp.eq.s32.totalorder %s116, 0
      %s119 = sadd.s32 %s118, 1
      %s120 = scalar_select %p117, %s118, %s119
      %p123 = pneg %p117
      %p124 = scmp.eq.s32.totalorder %s22, 3
      %p125 = por %p123, %p124
      %p126 = scmp.ne.s32.totalorder %s118, %s121
      %p127 = scmp.eq.s32.totalorder %s22, 0
      %p128 = por %p126, %p127
      %p129 = scmp.ne.s32.totalorder %s118, %s121
      %p130 = scmp.eq.s32.totalorder %s27, 3
      %p131 = por %p129, %p130
      %p132 = scmp.ne.s32.totalorder %s121, %s122
      %p133 = scmp.eq.s32.totalorder %s27, 0
      %p134 = por %p132, %p133
      %p135 = scmp.ne.s32.totalorder %s121, %s122
      %p136 = scmp.eq.s32.totalorder %s28, 3
      %p137 = por %p135, %p136
      %p139 = scmp.ne.s32.totalorder %s122, %s138
      %p140 = scmp.eq.s32.totalorder %s28, 0
      %p141 = por %p139, %p140
      %s143 = sadd.s32 %s142, 1
      %p146 = scmp.eq.s32.totalorder %s22, 3
      %p147 = scmp.ne.s32.totalorder %s142, %s144
      %p148 = scmp.eq.s32.totalorder %s22, 0
      %p149 = por %p147, %p148
      %p150 = scmp.ne.s32.totalorder %s142, %s144
      %p151 = scmp.eq.s32.totalorder %s27, 3
      %p152 = por %p150, %p151
      %p153 = scmp.ne.s32.totalorder %s144, %s145
      %p154 = scmp.eq.s32.totalorder %s27, 0
      %p155 = por %p153, %p154
      %p156 = scmp.ne.s32.totalorder %s144, %s145
      %p157 = scmp.eq.s32.totalorder %s28, 3
      %p158 = por %p156, %p157
      %p160 = scmp.ne.s32.totalorder %s145, %s159
      %p161 = scmp.eq.s32.totalorder %s28, 0
      %p162 = por %p160, %p161
      %s164 = sadd.s32 %s163, 1
      %p167 = scmp.eq.s32.totalorder %s22, 3
      %p168 = scmp.ne.s32.totalorder %s163, %s165
      %p169 = scmp.eq.s32.totalorder %s22, 0
      %p170 = por %p168, %p169
      %p171 = scmp.ne.s32.totalorder %s163, %s165
      %p172 = scmp.eq.s32.totalorder %s27, 3
      %p173 = por %p171, %p172
      %p174 = scmp.ne.s32.totalorder %s165, %s166
      %p175 = scmp.eq.s32.totalorder %s27, 0
      %p176 = por %p174, %p175
      %p177 = scmp.ne.s32.totalorder %s165, %s166
      %p178 = scmp.eq.s32.totalorder %s28, 3
      %p179 = por %p177, %p178
      %p181 = scmp.ne.s32.totalorder %s166, %s180
      %p182 = scmp.eq.s32.totalorder %s28, 0
      %p183 = por %p181, %p182
      %s185 = sadd.s32 %s184, 1
      %p188 = scmp.eq.s32.totalorder %s22, 3
      %p189 = scmp.ne.s32.totalorder %s184, %s186
      %p190 = scmp.eq.s32.totalorder %s22, 0
      %p191 = por %p189, %p190
      %p192 = scmp.ne.s32.totalorder %s184, %s186
      %p193 = scmp.eq.s32.totalorder %s27, 3
      %p194 = por %p192, %p193
      %p195 = scmp.ne.s32.totalorder %s186, %s187
      %p196 = scmp.eq.s32.totalorder %s27, 0
      %p197 = por %p195, %p196
      %p198 = scmp.ne.s32.totalorder %s186, %s187
      %p199 = scmp.eq.s32.totalorder %s28, 3
      %p200 = por %p198, %p199
      %p202 = scmp.ne.s32.totalorder %s187, %s201
      %p203 = scmp.eq.s32.totalorder %s28, 0
      %p204 = por %p202, %p203
      %s206 = sadd.s32 %s205, 1
      %p209 = scmp.eq.s32.totalorder %s22, 3
      %p210 = scmp.ne.s32.totalorder %s205, %s207
      %p211 = scmp.eq.s32.totalorder %s22, 0
      %p212 = por %p210, %p211
      %p213 = scmp.ne.s32.totalorder %s205, %s207
      %p214 = scmp.eq.s32.totalorder %s27, 3
      %p215 = por %p213, %p214
      %p216 = scmp.ne.s32.totalorder %s207, %s208
      %p217 = scmp.eq.s32.totalorder %s27, 0
      %p218 = por %p216, %p217
      %p219 = scmp.ne.s32.totalorder %s207, %s208
      %p220 = scmp.eq.s32.totalorder %s28, 3
      %p221 = por %p219, %p220
      %p223 = scmp.ne.s32.totalorder %s208, %s222
      %p224 = scmp.eq.s32.totalorder %s28, 0
      %p225 = por %p223, %p224
      %s226 = ssub.s32 %s29, %s41
      %s227 = ssub.s32 %s30, %s37
      %s228 = sor.u32 %s226, %s227
      %p229 = scmp.eq.s32.totalorder %s228, 0
      %s231 = sadd.s32 %s230, 1
      %s232 = scalar_select %p229, %s230, %s231
      %p235 = pneg %p229
      %p236 = scmp.eq.s32.totalorder %s22, 3
      %p237 = por %p235, %p236
      %p238 = scmp.ne.s32.totalorder %s230, %s233
      %p239 = scmp.eq.s32.totalorder %s22, 0
      %p240 = por %p238, %p239
      %p241 = scmp.ne.s32.totalorder %s230, %s233
      %p242 = scmp.eq.s32.totalorder %s27, 3
      %p243 = por %p241, %p242
      %p244 = scmp.ne.s32.totalorder %s233, %s234
      %p245 = scmp.eq.s32.totalorder %s27, 0
      %p246 = por %p244, %p245
      %p247 = scmp.ne.s32.totalorder %s233, %s234
      %p248 = scmp.eq.s32.totalorder %s28, 3
      %p249 = por %p247, %p248
      %p251 = scmp.ne.s32.totalorder %s234, %s250
      %p252 = scmp.eq.s32.totalorder %s28, 0
      %p253 = por %p251, %p252
      %p254 = scmp.le.s32.totalorder 1, %s22
      %p255 = scmp.lt.s32.totalorder %s22, 5
      %p256 = pnand %p254, %p255
      %p257 = pneg %p256
      // Predicated region
      $region9: #{res_conv_forward.1} parent=5 // pred_check
        _
      $region10: #{res_conv_forward.1} parent=5 // pred_check_branch
        %259 = sbr.rel (%p256) target = $region12
      $region11: #{res_conv_forward.1} parent=5 // pred_region
        %s260 = ssub.s32 %s22, 1
        // Predicated region
        $region13: #{res_conv_forward.1} parent=11 // pred_check
          %p261 = pneg %p155
        $region14: #{res_conv_forward.1} parent=11 // pred_check_branch
          %263 = sbr.rel (%p261) target = $region16
        $region15: #{res_conv_forward.1} parent=11 // pred_region
          _
        $region16: #{res_conv_forward.1} parent=11 // pred_fallthru
          _
        // Predicated region
        $region17: #{res_conv_forward.1} parent=11 // pred_check
          %p264 = pneg %p176
        $region18: #{res_conv_forward.1} parent=11 // pred_check_branch
          %266 = sbr.rel (%p264) target = $region20
        $region19: #{res_conv_forward.1} parent=11 // pred_region
          _
        $region20: #{res_conv_forward.1} parent=11 // pred_fallthru
          _
        // Predicated region
        $region21: #{res_conv_forward.1} parent=11 // pred_check
          %p267 = pneg %p197
        $region22: #{res_conv_forward.1} parent=11 // pred_check_branch
          %269 = sbr.rel (%p267) target = $region24
        $region23: #{res_conv_forward.1} parent=11 // pred_region
          _
        $region24: #{res_conv_forward.1} parent=11 // pred_fallthru
          _
        // Predicated region
        $region25: #{res_conv_forward.1} parent=11 // pred_check
          %p270 = pneg %p218
        $region26: #{res_conv_forward.1} parent=11 // pred_check_branch
          %272 = sbr.rel (%p270) target = $region28
        $region27: #{res_conv_forward.1} parent=11 // pred_region
          _
        $region28: #{res_conv_forward.1} parent=11 // pred_fallthru
          _
      $region12: #{res_conv_forward.1} parent=5 // pred_fallthru
        _
      %p273 = scmp.lt.s32.totalorder %s22, 4
      // Predicated region
      $region29: #{res_conv_forward.1} parent=5 // pred_check
        %p274 = pneg %p273
      $region30: #{res_conv_forward.1} parent=5 // pred_check_branch
        %276 = sbr.rel (%p274) target = $region32
      $region31: #{res_conv_forward.1} parent=5 // pred_region
        // Predicated region
        $region33: #{res_conv_forward.1} parent=31 // pred_check
          %p277 = pneg %p64
        $region34: #{res_conv_forward.1} parent=31 // pred_check_branch
          %279 = sbr.rel (%p277) target = $region36
        $region35: #{res_conv_forward.1} parent=31 // pred_region
          %s280 = sand.u32 %s54, 1
          %s281 = scalar_lea.sflag [#allocation3], %s280
          %s282 = sand.u32 %s54, 1
          %s283 = smul.addr %s282, 16
          %s284 = scalar_lea.vmem [#allocation2], %s283
          %s285 = smul.u32 %s30, 8
          %s286 = ssub.s32 %s285, 1
          %p287 = scmp.gt.s32.totalorder %s286, 0
          %s288 = scalar_select %p287, %s286, 0
          %290 = vsyncadd %s281, 0
          %s291 = smul.addr %s288, 2
          %s292 = smul.addr %s29, 32
          %s293 = sadd.s32 %s291, %s292
          %s294 = smul.addr %s293, 8
          %s295 = scalar_lea.hbm %s0, %s294
          %s296 = sshll.u32 %s295, 4
          %s297 = int_to_ptr.hbm [resolvable:$true] %s296
          %s298 = sshll.u32 %s284, 4
          %s299 = int_to_ptr.vmem [resolvable:$true] %s298
          %304 = dma.hbm_to_vmem [thread:$0]  %s297, 256, %s299, %s281, 128, 128, 8
        $region36: #{res_conv_forward.1} parent=31 // pred_fallthru
          _
        // Predicated region
        $region37: #{res_conv_forward.1} parent=31 // pred_check
          %p305 = pneg %p92
        $region38: #{res_conv_forward.1} parent=31 // pred_check_branch
          %307 = sbr.rel (%p305) target = $region40
        $region39: #{res_conv_forward.1} parent=31 // pred_region
          %s308 = sand.u32 %s22, 1
          %s309 = scalar_lea.sflag [#allocation6], %s308
          %s310 = sand.u32 %s82, 1
          %s311 = smul.addr %s310, 128
          %s312 = scalar_lea.vmem [#allocation5], %s311
          %s313 = smul.u32 8, %s30
          %315 = vsyncadd %s309, 0
          %s316 = smul.addr %s313, 2
          %s317 = smul.addr %s29, 32
          %s318 = sadd.s32 %s316, %s317
          %s319 = smul.addr %s318, 8
          %s320 = scalar_lea.hbm %s1, %s319
          %s321 = sshll.u32 %s320, 4
          %s322 = int_to_ptr.hbm [resolvable:$true] %s321
          %s323 = sshll.u32 %s312, 4
          %s324 = int_to_ptr.vmem [resolvable:$true] %s323
          %329 = dma.hbm_to_vmem [thread:$0]  %s322, 2048, %s324, %s309, 128, 128, 8
        $region40: #{res_conv_forward.1} parent=31 // pred_fallthru
          _
        // Predicated region
        $region41: #{res_conv_forward.1} parent=31 // pred_check
          %p330 = pneg %p128
        $region42: #{res_conv_forward.1} parent=31 // pred_check_branch
          %332 = sbr.rel (%p330) target = $region44
        $region43: #{res_conv_forward.1} parent=31 // pred_region
          %s333 = sand.u32 %s22, 1
          %s334 = scalar_lea.sflag [#allocation6], %s333
          %s335 = sand.u32 %s118, 1
          %s336 = smul.addr %s335, 16
          %s337 = scalar_lea.vmem [#allocation7], %s336
          %s338 = smul.u32 %s30, 8
          %s339 = sadd.s32 %s338, 8
          %p340 = scmp.lt.s32.totalorder %s339, 15
          %s341 = scalar_select %p340, %s339, 15
          %343 = vsyncadd %s334, 0
          %s344 = smul.addr %s341, 2
          %s345 = smul.addr %s29, 32
          %s346 = sadd.s32 %s344, %s345
          %s347 = smul.addr %s346, 8
          %s348 = scalar_lea.hbm %s2, %s347
          %s349 = sshll.u32 %s348, 4
          %s350 = int_to_ptr.hbm [resolvable:$true] %s349
          %s351 = sshll.u32 %s337, 4
          %s352 = int_to_ptr.vmem [resolvable:$true] %s351
          %357 = dma.hbm_to_vmem [thread:$0]  %s350, 256, %s352, %s334, 128, 128, 8
        $region44: #{res_conv_forward.1} parent=31 // pred_fallthru
          _
      $region32: #{res_conv_forward.1} parent=5 // pred_fallthru
        _
      %p358 = scmp.le.s32.totalorder 1, %s22
      %p359 = scmp.lt.s32.totalorder %s22, 5
      %p360 = pnand %p358, %p359
      %p361 = pneg %p360
      // Predicated region
      $region45: #{res_conv_forward.1} parent=5 // pred_check
        _
      $region46: #{res_conv_forward.1} parent=5 // pred_check_branch
        %363 = sbr.rel (%p360) target = $region48
      $region47: #{res_conv_forward.1} parent=5 // pred_region
        %s364 = ssub.s32 %s22, 1
        %s365 = sand.u32 %s57, 1
        %s366 = scalar_lea.sflag [#allocation3], %s365
        %s367 = sand.u32 %s57, 1
        %s368 = smul.addr %s367, 16
        %s369 = scalar_lea.vmem [#allocation2], %s368
        // Predicated region
        $region49: #{res_conv_forward.1} parent=47 // pred_check
          %p370 = pneg %p70
        $region50: #{res_conv_forward.1} parent=47 // pred_check_branch
          %372 = sbr.rel (%p370) target = $region52
        $region51: #{res_conv_forward.1} parent=47 // pred_region
          %374 = dma.done %s366, 256
        $region52: #{res_conv_forward.1} parent=47 // pred_fallthru
          _
        %s375 = sand.u32 %s27, 1
        %s376 = scalar_lea.sflag [#allocation6], %s375
        %s377 = sand.u32 %s85, 1
        %s378 = smul.addr %s377, 128
        %s379 = scalar_lea.vmem [#allocation5], %s378
        // Predicated region
        $region53: #{res_conv_forward.1} parent=47 // pred_check
          %p380 = pneg %p98
        $region54: #{res_conv_forward.1} parent=47 // pred_check_branch
          %382 = sbr.rel (%p380) target = $region56
        $region55: #{res_conv_forward.1} parent=47 // pred_region
          %384 = dma.done %s376, 2048
        $region56: #{res_conv_forward.1} parent=47 // pred_fallthru
          _
        %s385 = sand.u32 %s27, 1
        %s386 = scalar_lea.sflag [#allocation6], %s385
        %s387 = sand.u32 %s121, 1
        %s388 = smul.addr %s387, 16
        %s389 = scalar_lea.vmem [#allocation7], %s388
        // Predicated region
        $region57: #{res_conv_forward.1} parent=47 // pred_check
          %p390 = pneg %p134
        $region58: #{res_conv_forward.1} parent=47 // pred_check_branch
          %392 = sbr.rel (%p390) target = $region60
        $region59: #{res_conv_forward.1} parent=47 // pred_region
          %394 = dma.done %s386, 256
        $region60: #{res_conv_forward.1} parent=47 // pred_fallthru
          _
        %s395 = sand.u32 %s57, 1
        %s396 = scalar_lea.sflag [#allocation3], %s395
        %s397 = sand.u32 %s57, 1
        %s398 = smul.addr %s397, 16
        %s399 = scalar_lea.vmem [#allocation2], %s398
        %p400 = pneg %p70
        %p401 = pneg %p67
        %s402 = sand.u32 %s27, 1
        %s403 = scalar_lea.sflag [#allocation6], %s402
        %s404 = sand.u32 %s85, 1
        %s405 = smul.addr %s404, 128
        %s406 = scalar_lea.vmem [#allocation5], %s405
        %p407 = pneg %p98
        %p408 = pneg %p95
        %s409 = sand.u32 %s27, 1
        %s410 = scalar_lea.sflag [#allocation6], %s409
        %s411 = sand.u32 %s121, 1
        %s412 = smul.addr %s411, 16
        %s413 = scalar_lea.vmem [#allocation7], %s412
        %p414 = pneg %p134
        %p415 = pneg %p131
        %p416 = pneg %p155
        %p417 = pneg %p152
        %p418 = pneg %p176
        %p419 = pneg %p173
        %p420 = pneg %p197
        %p421 = pneg %p194
        %p422 = pneg %p218
        %p423 = pneg %p215
        %p424 = pneg %p246
        %p425 = pneg %p243
        %s426 = sand.u32 %s233, 1
        %s427 = scalar_lea.sflag [#allocation4], %s426
        %s428 = sand.u32 %s233, 1
        %s429 = smul.addr %s428, 128
        %s430 = scalar_lea.vmem [#allocation8], %s429
        %s431 = smul.u32 %s32, 8
        %s432 = ssub.s32 %s431, 1
        %p433 = scmp.gt.s32.totalorder %s432, 0
        %s434 = scalar_select %p433, %s432, 0
        %s435 = smul.u32 8, %s32
        %s436 = smul.u32 %s32, 8
        %s437 = sadd.s32 %s436, 8
        %p438 = scmp.lt.s32.totalorder %s437, 15
        %s439 = scalar_select %p438, %s437, 15
        %s440 = smul.u32 8, %s32
        %v442 = vld [vmem:[%s379] sm:$0xff]
        %v443 = vld [vmem:[%s379 + $0x8] sm:$0xff]
        %v444 = vld [vmem:[%s379 + $0x10] sm:$0xff]
        %v445 = vld [vmem:[%s379 + $0x18] sm:$0xff]
        %v446 = vld [vmem:[%s379 + $0x20] sm:$0xff]
        %v447 = vld [vmem:[%s379 + $0x28] sm:$0xff]
        %v448 = vld [vmem:[%s379 + $0x30] sm:$0xff]
        %v449 = vld [vmem:[%s379 + $0x38] sm:$0xff]
        %v450 = vld [vmem:[%s379 + $0x40] sm:$0xff]
        %v451 = vld [vmem:[%s379 + $0x48] sm:$0xff]
        %v452 = vld [vmem:[%s379 + $0x50] sm:$0xff]
        %v453 = vld [vmem:[%s379 + $0x58] sm:$0xff]
        %v454 = vld [vmem:[%s379 + $0x60] sm:$0xff]
        %v455 = vld [vmem:[%s379 + $0x68] sm:$0xff]
        %v456 = vld [vmem:[%s379 + $0x70] sm:$0xff]
        %v457 = vld [vmem:[%s379 + $0x78] sm:$0xff]
        %p458 = scmp.gt.s32.totalorder %s32, 0
        %v459 = vld [vmem:[%s369] sm:$0xff]
        %v460 = vld [vmem:[%s369 + $0x8] sm:$0xff]
        %s461 = scalar_select %p458, 1, 0
        %v462 = vstv %s461
        %vm463 = vcmp.eq.s32.totalorder %v462, 1
        %v464 = vsel %vm463, %v459, 0.0
        %v465 = vsel %vm463, %v460, 0.0
        %p466 = scmp.lt.s32.totalorder %s32, 1
        %v467 = vld [vmem:[%s389] sm:$0xff]
        %v468 = vld [vmem:[%s389 + $0x8] sm:$0xff]
        %s469 = scalar_select %p466, 1, 0
        %v470 = vstv %s469
        %vm471 = vcmp.eq.s32.totalorder %v470, 1
        %v472 = vsel %vm471, %v467, 0.0
        %v473 = vsel %vm471, %v468, 0.0
        %v474 = vlaneseq
        %v475 = vshrl.u32 %v474, 7
        %v476 = vadd.s32 %v475, 8
        %vm477 = vcmp.gt.s32.totalorder %v475, 0
        %vm478 = vcmp.gt.s32.totalorder %v476, 0
        %v479 = vrot.slane %v464, 7
        %v480 = vrot.slane %v442, 7
        %v481 = vrot.slane %v444, 7
        %v482 = vrot.slane %v446, 7
        %v483 = vrot.slane %v448, 7
        %v484 = vrot.slane %v450, 7
        %v485 = vrot.slane %v452, 7
        %v486 = vrot.slane %v454, 7
        %v487 = vrot.slane %v456, 7
        %v488 = vrot.slane %v472, 7
        %v489 = vrot.slane %v465, 7
        %v490 = vrot.slane %v443, 7
        %v491 = vrot.slane %v445, 7
        %v492 = vrot.slane %v447, 7
        %v493 = vrot.slane %v449, 7
        %v494 = vrot.slane %v451, 7
        %v495 = vrot.slane %v453, 7
        %v496 = vrot.slane %v455, 7
        %v497 = vrot.slane %v457, 7
        %v498 = vrot.slane %v473, 7
        %vm499 = vcmp.lt.s32.totalorder %v475, 1
        %v500 = vsel %vm499, %v479, %v489
        %v501 = vsel %vm499, %v480, %v490
        %v502 = vsel %vm499, %v481, %v491
        %v503 = vsel %vm499, %v482, %v492
        %v504 = vsel %vm499, %v483, %v493
        %v505 = vsel %vm499, %v484, %v494
        %v506 = vsel %vm499, %v485, %v495
        %v507 = vsel %vm499, %v486, %v496
        %v508 = vsel %vm499, %v487, %v497
        %v509 = vsel %vm499, %v488, %v498
        %v510 = vsel %vm499, %v489, %v479
        %v511 = vsel %vm499, %v490, %v480
        %v512 = vsel %vm499, %v491, %v481
        %v513 = vsel %vm499, %v492, %v482
        %v514 = vsel %vm499, %v493, %v483
        %v515 = vsel %vm499, %v494, %v484
        %v516 = vsel %vm499, %v495, %v485
        %v517 = vsel %vm499, %v496, %v486
        %v518 = vsel %vm499, %v497, %v487
        %v519 = vsel %vm499, %v498, %v488
        %v520 = vsel %vm477, 1, 0
        %v521 = vsel %vm478, 1, 0
        %vm522 = vcmp.eq.s32.totalorder %v520, 1
        %vm523 = vcmp.eq.s32.totalorder %v521, 1
        %v524 = vsel %vm522, %v510, 0.0
        %v525 = vsel %vm523, %v500, 0.0
        %v526 = vsel %vm522, %v511, 0.0
        %v527 = vsel %vm523, %v501, 0.0
        %v528 = vsel %vm522, %v512, 0.0
        %v529 = vsel %vm523, %v502, 0.0
        %v530 = vsel %vm522, %v513, 0.0
        %v531 = vsel %vm523, %v503, 0.0
        %v532 = vsel %vm522, %v514, 0.0
        %v533 = vsel %vm523, %v504, 0.0
        %v534 = vsel %vm522, %v515, 0.0
        %v535 = vsel %vm523, %v505, 0.0
        %v536 = vsel %vm522, %v516, 0.0
        %v537 = vsel %vm523, %v506, 0.0
        %v538 = vsel %vm522, %v517, 0.0
        %v539 = vsel %vm523, %v507, 0.0
        %v540 = vsel %vm522, %v518, 0.0
        %v541 = vsel %vm523, %v508, 0.0
        %v542 = vsel %vm522, %v519, 0.0
        %v543 = vsel %vm523, %v509, 0.0
        %vm544 = vcmp.lt.s32.totalorder %v475, 15
        %vm545 = vcmp.lt.s32.totalorder %v476, 15
        %v546 = vrot.slane %v464, 1
        %v547 = vrot.slane %v442, 1
        %v548 = vrot.slane %v444, 1
        %v549 = vrot.slane %v446, 1
        %v550 = vrot.slane %v448, 1
        %v551 = vrot.slane %v450, 1
        %v552 = vrot.slane %v452, 1
        %v553 = vrot.slane %v454, 1
        %v554 = vrot.slane %v456, 1
        %v555 = vrot.slane %v472, 1
        %v556 = vrot.slane %v465, 1
        %v557 = vrot.slane %v443, 1
        %v558 = vrot.slane %v445, 1
        %v559 = vrot.slane %v447, 1
        %v560 = vrot.slane %v449, 1
        %v561 = vrot.slane %v451, 1
        %v562 = vrot.slane %v453, 1
        %v563 = vrot.slane %v455, 1
        %v564 = vrot.slane %v457, 1
        %v565 = vrot.slane %v473, 1
        %vm566 = vcmp.lt.s32.totalorder %v475, 7
        %v567 = vsel %vm566, %v546, %v556
        %v568 = vsel %vm566, %v547, %v557
        %v569 = vsel %vm566, %v548, %v558
        %v570 = vsel %vm566, %v549, %v559
        %v571 = vsel %vm566, %v550, %v560
        %v572 = vsel %vm566, %v551, %v561
        %v573 = vsel %vm566, %v552, %v562
        %v574 = vsel %vm566, %v553, %v563
        %v575 = vsel %vm566, %v554, %v564
        %v576 = vsel %vm566, %v555, %v565
        %v577 = vsel %vm566, %v556, %v546
        %v578 = vsel %vm566, %v557, %v547
        %v579 = vsel %vm566, %v558, %v548
        %v580 = vsel %vm566, %v559, %v549
        %v581 = vsel %vm566, %v560, %v550
        %v582 = vsel %vm566, %v561, %v551
        %v583 = vsel %vm566, %v562, %v552
        %v584 = vsel %vm566, %v563, %v553
        %v585 = vsel %vm566, %v564, %v554
        %v586 = vsel %vm566, %v565, %v555
        %v587 = vsel %vm544, 1, 0
        %v588 = vsel %vm545, 1, 0
        %vm589 = vcmp.eq.s32.totalorder %v587, 1
        %vm590 = vcmp.eq.s32.totalorder %v588, 1
        %v591 = vsel %vm589, %v567, 0.0
        %v592 = vsel %vm590, %v577, 0.0
        %v593 = vsel %vm589, %v568, 0.0
        %v594 = vsel %vm590, %v578, 0.0
        %v595 = vsel %vm589, %v569, 0.0
        %v596 = vsel %vm590, %v579, 0.0
        %v597 = vsel %vm589, %v570, 0.0
        %v598 = vsel %vm590, %v580, 0.0
        %v599 = vsel %vm589, %v571, 0.0
        %v600 = vsel %vm590, %v581, 0.0
        %v601 = vsel %vm589, %v572, 0.0
        %v602 = vsel %vm590, %v582, 0.0
        %v603 = vsel %vm589, %v573, 0.0
        %v604 = vsel %vm590, %v583, 0.0
        %v605 = vsel %vm589, %v574, 0.0
        %v606 = vsel %vm590, %v584, 0.0
        %v607 = vsel %vm589, %v575, 0.0
        %v608 = vsel %vm590, %v585, 0.0
        %v609 = vsel %vm589, %v576, 0.0
        %v610 = vsel %vm590, %v586, 0.0
        %v611 = vld [vmem:[%s3] sm:$0xff]
        %v612 = vld [vmem:[%s3 + $0x8] sm:$0x1]
        %v613 = vperm.slane %v611, 0
        %v614 = vmul.f32 %v524, %v613
        %v615 = vmul.f32 %v525, %v613
        %v616 = vmul.f32 %v526, %v613
        %v617 = vmul.f32 %v527, %v613
        %v618 = vmul.f32 %v528, %v613
        %v619 = vmul.f32 %v529, %v613
        %v620 = vmul.f32 %v530, %v613
        %v621 = vmul.f32 %v531, %v613
        %v622 = vmul.f32 %v532, %v613
        %v623 = vmul.f32 %v533, %v613
        %v624 = vmul.f32 %v534, %v613
        %v625 = vmul.f32 %v535, %v613
        %v626 = vmul.f32 %v536, %v613
        %v627 = vmul.f32 %v537, %v613
        %v628 = vmul.f32 %v538, %v613
        %v629 = vmul.f32 %v539, %v613
        %v630 = vperm.slane %v611, 1
        %v631 = vmul.f32 %v464, %v630
        %v632 = vmul.f32 %v465, %v630
        %v633 = vmul.f32 %v442, %v630
        %v634 = vmul.f32 %v443, %v630
        %v635 = vmul.f32 %v444, %v630
        %v636 = vmul.f32 %v445, %v630
        %v637 = vmul.f32 %v446, %v630
        %v638 = vmul.f32 %v447, %v630
        %v639 = vmul.f32 %v448, %v630
        %v640 = vmul.f32 %v449, %v630
        %v641 = vmul.f32 %v450, %v630
        %v642 = vmul.f32 %v451, %v630
        %v643 = vmul.f32 %v452, %v630
        %v644 = vmul.f32 %v453, %v630
        %v645 = vmul.f32 %v454, %v630
        %v646 = vmul.f32 %v455, %v630
        %v647 = vadd.f32 %v614, %v631
        %v648 = vadd.f32 %v615, %v632
        %v649 = vadd.f32 %v616, %v633
        %v650 = vadd.f32 %v617, %v634
        %v651 = vadd.f32 %v618, %v635
        %v652 = vadd.f32 %v619, %v636
        %v653 = vadd.f32 %v620, %v637
        %v654 = vadd.f32 %v621, %v638
        %v655 = vadd.f32 %v622, %v639
        %v656 = vadd.f32 %v623, %v640
        %v657 = vadd.f32 %v624, %v641
        %v658 = vadd.f32 %v625, %v642
        %v659 = vadd.f32 %v626, %v643
        %v660 = vadd.f32 %v627, %v644
        %v661 = vadd.f32 %v628, %v645
        %v662 = vadd.f32 %v629, %v646
        %v663 = vperm.slane %v611, 2
        %v664 = vmul.f32 %v591, %v663
        %v665 = vmul.f32 %v592, %v663
        %v666 = vmul.f32 %v593, %v663
        %v667 = vmul.f32 %v594, %v663
        %v668 = vmul.f32 %v595, %v663
        %v669 = vmul.f32 %v596, %v663
        %v670 = vmul.f32 %v597, %v663
        %v671 = vmul.f32 %v598, %v663
        %v672 = vmul.f32 %v599, %v663
        %v673 = vmul.f32 %v600, %v663
        %v674 = vmul.f32 %v601, %v663
        %v675 = vmul.f32 %v602, %v663
        %v676 = vmul.f32 %v603, %v663
        %v677 = vmul.f32 %v604, %v663
        %v678 = vmul.f32 %v605, %v663
        %v679 = vmul.f32 %v606, %v663
        %v680 = vadd.f32 %v647, %v664
        %v681 = vadd.f32 %v648, %v665
        %v682 = vadd.f32 %v649, %v666
        %v683 = vadd.f32 %v650, %v667
        %v684 = vadd.f32 %v651, %v668
        %v685 = vadd.f32 %v652, %v669
        %v686 = vadd.f32 %v653, %v670
        %v687 = vadd.f32 %v654, %v671
        %v688 = vadd.f32 %v655, %v672
        %v689 = vadd.f32 %v656, %v673
        %v690 = vadd.f32 %v657, %v674
        %v691 = vadd.f32 %v658, %v675
        %v692 = vadd.f32 %v659, %v676
        %v693 = vadd.f32 %v660, %v677
        %v694 = vadd.f32 %v661, %v678
        %v695 = vadd.f32 %v662, %v679
        %v696 = vperm.slane %v611, 3
        %v697 = vmul.f32 %v526, %v696
        %v698 = vmul.f32 %v527, %v696
        %v699 = vmul.f32 %v528, %v696
        %v700 = vmul.f32 %v529, %v696
        %v701 = vmul.f32 %v530, %v696
        %v702 = vmul.f32 %v531, %v696
        %v703 = vmul.f32 %v532, %v696
        %v704 = vmul.f32 %v533, %v696
        %v705 = vmul.f32 %v534, %v696
        %v706 = vmul.f32 %v535, %v696
        %v707 = vmul.f32 %v536, %v696
        %v708 = vmul.f32 %v537, %v696
        %v709 = vmul.f32 %v538, %v696
        %v710 = vmul.f32 %v539, %v696
        %v711 = vmul.f32 %v540, %v696
        %v712 = vmul.f32 %v541, %v696
        %v713 = vadd.f32 %v680, %v697
        %v714 = vadd.f32 %v681, %v698
        %v715 = vadd.f32 %v682, %v699
        %v716 = vadd.f32 %v683, %v700
        %v717 = vadd.f32 %v684, %v701
        %v718 = vadd.f32 %v685, %v702
        %v719 = vadd.f32 %v686, %v703
        %v720 = vadd.f32 %v687, %v704
        %v721 = vadd.f32 %v688, %v705
        %v722 = vadd.f32 %v689, %v706
        %v723 = vadd.f32 %v690, %v707
        %v724 = vadd.f32 %v691, %v708
        %v725 = vadd.f32 %v692, %v709
        %v726 = vadd.f32 %v693, %v710
        %v727 = vadd.f32 %v694, %v711
        %v728 = vadd.f32 %v695, %v712
        %v729 = vperm.slane %v611, 4
        %v730 = vmul.f32 %v442, %v729
        %v731 = vmul.f32 %v443, %v729
        %v732 = vmul.f32 %v444, %v729
        %v733 = vmul.f32 %v445, %v729
        %v734 = vmul.f32 %v446, %v729
        %v735 = vmul.f32 %v447, %v729
        %v736 = vmul.f32 %v448, %v729
        %v737 = vmul.f32 %v449, %v729
        %v738 = vmul.f32 %v450, %v729
        %v739 = vmul.f32 %v451, %v729
        %v740 = vmul.f32 %v452, %v729
        %v741 = vmul.f32 %v453, %v729
        %v742 = vmul.f32 %v454, %v729
        %v743 = vmul.f32 %v455, %v729
        %v744 = vmul.f32 %v456, %v729
        %v745 = vmul.f32 %v457, %v729
        %v746 = vadd.f32 %v713, %v730
        %v747 = vadd.f32 %v714, %v731
        %v748 = vadd.f32 %v715, %v732
        %v749 = vadd.f32 %v716, %v733
        %v750 = vadd.f32 %v717, %v734
        %v751 = vadd.f32 %v718, %v735
        %v752 = vadd.f32 %v719, %v736
        %v753 = vadd.f32 %v720, %v737
        %v754 = vadd.f32 %v721, %v738
        %v755 = vadd.f32 %v722, %v739
        %v756 = vadd.f32 %v723, %v740
        %v757 = vadd.f32 %v724, %v741
        %v758 = vadd.f32 %v725, %v742
        %v759 = vadd.f32 %v726, %v743
        %v760 = vadd.f32 %v727, %v744
        %v761 = vadd.f32 %v728, %v745
        %v762 = vperm.slane %v611, 5
        %v763 = vmul.f32 %v593, %v762
        %v764 = vmul.f32 %v594, %v762
        %v765 = vmul.f32 %v595, %v762
        %v766 = vmul.f32 %v596, %v762
        %v767 = vmul.f32 %v597, %v762
        %v768 = vmul.f32 %v598, %v762
        %v769 = vmul.f32 %v599, %v762
        %v770 = vmul.f32 %v600, %v762
        %v771 = vmul.f32 %v601, %v762
        %v772 = vmul.f32 %v602, %v762
        %v773 = vmul.f32 %v603, %v762
        %v774 = vmul.f32 %v604, %v762
        %v775 = vmul.f32 %v605, %v762
        %v776 = vmul.f32 %v606, %v762
        %v777 = vmul.f32 %v607, %v762
        %v778 = vmul.f32 %v608, %v762
        %v779 = vadd.f32 %v746, %v763
        %v780 = vadd.f32 %v747, %v764
        %v781 = vadd.f32 %v748, %v765
        %v782 = vadd.f32 %v749, %v766
        %v783 = vadd.f32 %v750, %v767
        %v784 = vadd.f32 %v751, %v768
        %v785 = vadd.f32 %v752, %v769
        %v786 = vadd.f32 %v753, %v770
        %v787 = vadd.f32 %v754, %v771
        %v788 = vadd.f32 %v755, %v772
        %v789 = vadd.f32 %v756, %v773
        %v790 = vadd.f32 %v757, %v774
        %v791 = vadd.f32 %v758, %v775
        %v792 = vadd.f32 %v759, %v776
        %v793 = vadd.f32 %v760, %v777
        %v794 = vadd.f32 %v761, %v778
        %v795 = vperm.slane %v611, 6
        %v796 = vmul.f32 %v528, %v795
        %v797 = vmul.f32 %v529, %v795
        %v798 = vmul.f32 %v530, %v795
        %v799 = vmul.f32 %v531, %v795
        %v800 = vmul.f32 %v532, %v795
        %v801 = vmul.f32 %v533, %v795
        %v802 = vmul.f32 %v534, %v795
        %v803 = vmul.f32 %v535, %v795
        %v804 = vmul.f32 %v536, %v795
        %v805 = vmul.f32 %v537, %v795
        %v806 = vmul.f32 %v538, %v795
        %v807 = vmul.f32 %v539, %v795
        %v808 = vmul.f32 %v540, %v795
        %v809 = vmul.f32 %v541, %v795
        %v810 = vmul.f32 %v542, %v795
        %v811 = vmul.f32 %v543, %v795
        %v812 = vadd.f32 %v779, %v796
        %v813 = vadd.f32 %v780, %v797
        %v814 = vadd.f32 %v781, %v798
        %v815 = vadd.f32 %v782, %v799
        %v816 = vadd.f32 %v783, %v800
        %v817 = vadd.f32 %v784, %v801
        %v818 = vadd.f32 %v785, %v802
        %v819 = vadd.f32 %v786, %v803
        %v820 = vadd.f32 %v787, %v804
        %v821 = vadd.f32 %v788, %v805
        %v822 = vadd.f32 %v789, %v806
        %v823 = vadd.f32 %v790, %v807
        %v824 = vadd.f32 %v791, %v808
        %v825 = vadd.f32 %v792, %v809
        %v826 = vadd.f32 %v793, %v810
        %v827 = vadd.f32 %v794, %v811
        %v828 = vperm.slane %v611, 7
        %v829 = vmul.f32 %v444, %v828
        %v830 = vmul.f32 %v445, %v828
        %v831 = vmul.f32 %v446, %v828
        %v832 = vmul.f32 %v447, %v828
        %v833 = vmul.f32 %v448, %v828
        %v834 = vmul.f32 %v449, %v828
        %v835 = vmul.f32 %v450, %v828
        %v836 = vmul.f32 %v451, %v828
        %v837 = vmul.f32 %v452, %v828
        %v838 = vmul.f32 %v453, %v828
        %v839 = vmul.f32 %v454, %v828
        %v840 = vmul.f32 %v455, %v828
        %v841 = vmul.f32 %v456, %v828
        %v842 = vmul.f32 %v457, %v828
        %v843 = vmul.f32 %v472, %v828
        %v844 = vmul.f32 %v473, %v828
        %v845 = vadd.f32 %v812, %v829
        %v846 = vadd.f32 %v813, %v830
        %v847 = vadd.f32 %v814, %v831
        %v848 = vadd.f32 %v815, %v832
        %v849 = vadd.f32 %v816, %v833
        %v850 = vadd.f32 %v817, %v834
        %v851 = vadd.f32 %v818, %v835
        %v852 = vadd.f32 %v819, %v836
        %v853 = vadd.f32 %v820, %v837
        %v854 = vadd.f32 %v821, %v838
        %v855 = vadd.f32 %v822, %v839
        %v856 = vadd.f32 %v823, %v840
        %v857 = vadd.f32 %v824, %v841
        %v858 = vadd.f32 %v825, %v842
        %v859 = vadd.f32 %v826, %v843
        %v860 = vadd.f32 %v827, %v844
        %v861 = vperm.slane %v612, 0
        %v862 = vmul.f32 %v595, %v861
        %v863 = vmul.f32 %v596, %v861
        %v864 = vmul.f32 %v597, %v861
        %v865 = vmul.f32 %v598, %v861
        %v866 = vmul.f32 %v599, %v861
        %v867 = vmul.f32 %v600, %v861
        %v868 = vmul.f32 %v601, %v861
        %v869 = vmul.f32 %v602, %v861
        %v870 = vmul.f32 %v603, %v861
        %v871 = vmul.f32 %v604, %v861
        %v872 = vmul.f32 %v605, %v861
        %v873 = vmul.f32 %v606, %v861
        %v874 = vmul.f32 %v607, %v861
        %v875 = vmul.f32 %v608, %v861
        %v876 = vmul.f32 %v609, %v861
        %v877 = vmul.f32 %v610, %v861
        %v878 = vadd.f32 %v845, %v862
        %v879 = vadd.f32 %v846, %v863
        %v880 = vadd.f32 %v847, %v864
        %v881 = vadd.f32 %v848, %v865
        %v882 = vadd.f32 %v849, %v866
        %v883 = vadd.f32 %v850, %v867
        %v884 = vadd.f32 %v851, %v868
        %v885 = vadd.f32 %v852, %v869
        %v886 = vadd.f32 %v853, %v870
        %v887 = vadd.f32 %v854, %v871
        %v888 = vadd.f32 %v855, %v872
        %v889 = vadd.f32 %v856, %v873
        %v890 = vadd.f32 %v857, %v874
        %v891 = vadd.f32 %v858, %v875
        %v892 = vadd.f32 %v859, %v876
        %v893 = vadd.f32 %v860, %v877
        %v894 = vld [vmem:[%s4] sm:$0x1]
        %v896 = vperm.slane %v894, 0
        %v898 = vadd.f32 %v878, %v896
        %v899 = vadd.f32 %v879, %v896
        %v900 = vadd.f32 %v880, %v896
        %v901 = vadd.f32 %v881, %v896
        %v902 = vadd.f32 %v882, %v896
        %v903 = vadd.f32 %v883, %v896
        %v904 = vadd.f32 %v884, %v896
        %v905 = vadd.f32 %v885, %v896
        %v906 = vadd.f32 %v886, %v896
        %v907 = vadd.f32 %v887, %v896
        %v908 = vadd.f32 %v888, %v896
        %v909 = vadd.f32 %v889, %v896
        %v910 = vadd.f32 %v890, %v896
        %v911 = vadd.f32 %v891, %v896
        %v912 = vadd.f32 %v892, %v896
        %v913 = vadd.f32 %v893, %v896
        %v914 = vmax.f32 %v898, 0.0
        %v915 = vmax.f32 %v899, 0.0
        %v916 = vmax.f32 %v900, 0.0
        %v917 = vmax.f32 %v901, 0.0
        %v918 = vmax.f32 %v902, 0.0
        %v919 = vmax.f32 %v903, 0.0
        %v920 = vmax.f32 %v904, 0.0
        %v921 = vmax.f32 %v905, 0.0
        %v922 = vmax.f32 %v906, 0.0
        %v923 = vmax.f32 %v907, 0.0
        %v924 = vmax.f32 %v908, 0.0
        %v925 = vmax.f32 %v909, 0.0
        %v926 = vmax.f32 %v910, 0.0
        %v927 = vmax.f32 %v911, 0.0
        %v928 = vmax.f32 %v912, 0.0
        %v929 = vmax.f32 %v913, 0.0
        %v930 = vpack.c.bf16 %v915, %v914
        %v931 = vpack.c.bf16 %v917, %v916
        %v932 = vpack.c.bf16 %v919, %v918
        %v933 = vpack.c.bf16 %v921, %v920
        %v934 = vpack.c.bf16 %v923, %v922
        %v935 = vpack.c.bf16 %v925, %v924
        %v936 = vpack.c.bf16 %v927, %v926
        %v937 = vpack.c.bf16 %v929, %v928
        %v938 = vld [vmem:[%s5] sm:$0xf]
        %v939 = vld [vmem:[%s5 + $0x4] sm:$0xf]
        %v940 = vld [vmem:[%s5 + $0x8] sm:$0xf]
        %v941 = vld [vmem:[%s5 + $0xc] sm:$0xf]
        %v946 = vunpack.c.l.b16 %v938
        %v947 = vunpack.c.l.b16 %v939
        %v948 = vunpack.c.l.b16 %v940
        %v949 = vunpack.c.l.b16 %v941
        %v950 = vpack.c.b16 %v947, %v946
        %v951 = vpack.c.b16 %v949, %v948
        %vm954 = vcmask 261120
        %v956 = vsel %vm954, %v930, 0
        %v959 = vsel %vm954, %v931, 0
        %v962 = vsel %vm954, %v932, 0
        %v965 = vsel %vm954, %v933, 0
        %v968 = vsel %vm954, %v934, 0
        %v971 = vsel %vm954, %v935, 0
        %v974 = vsel %vm954, %v936, 0
        %v977 = vsel %vm954, %v937, 0
        %979 = vmatpush.bf16.msra.mxu0 0
        %980 = vmatpush.bf16.msra.mxu0 0
        %981 = vmatpush.bf16.msra.mxu0 0
        %982 = vmatpush.bf16.msra.mxu0 0
        %983 = vmatpush.bf16.msra.mxu0 0
        %984 = vmatpush.bf16.msra.mxu0 0
        %985 = vmatpush.bf16.msra.mxu0 %v951
        %986 = vmatpush.bf16.msra.mxu0 %v950
        %987 = vmatmul.bf16.gmra.mxu0 %v956
        %v988 = vpop.f32.mrf.mxu0
        %v989 = vadd.f32 0.0, %v988
        %v990 = vpop.f32.mrf.mxu0
        %v991 = vadd.f32 0.0, %v990
        %992 = vmatmul.bf16.gmra.mxu0 %v959
        %v993 = vpop.f32.mrf.mxu0
        %v994 = vadd.f32 0.0, %v993
        %v995 = vpop.f32.mrf.mxu0
        %v996 = vadd.f32 0.0, %v995
        %997 = vmatmul.bf16.gmra.mxu0 %v962
        %v998 = vpop.f32.mrf.mxu0
        %v999 = vadd.f32 0.0, %v998
        %v1000 = vpop.f32.mrf.mxu0
        %v1001 = vadd.f32 0.0, %v1000
        %1002 = vmatmul.bf16.gmra.mxu0 %v965
        %v1003 = vpop.f32.mrf.mxu0
        %v1004 = vadd.f32 0.0, %v1003
        %v1005 = vpop.f32.mrf.mxu0
        %v1006 = vadd.f32 0.0, %v1005
        %1007 = vmatmul.bf16.gmra.mxu0 %v968
        %v1008 = vpop.f32.mrf.mxu0
        %v1009 = vadd.f32 0.0, %v1008
        %v1010 = vpop.f32.mrf.mxu0
        %v1011 = vadd.f32 0.0, %v1010
        %1012 = vmatmul.bf16.gmra.mxu0 %v971
        %v1013 = vpop.f32.mrf.mxu0
        %v1014 = vadd.f32 0.0, %v1013
        %v1015 = vpop.f32.mrf.mxu0
        %v1016 = vadd.f32 0.0, %v1015
        %1017 = vmatmul.bf16.gmra.mxu0 %v974
        %v1018 = vpop.f32.mrf.mxu0
        %v1019 = vadd.f32 0.0, %v1018
        %v1020 = vpop.f32.mrf.mxu0
        %v1021 = vadd.f32 0.0, %v1020
        %1022 = vmatmul.bf16.gmra.mxu0 %v977
        %v1023 = vpop.f32.mrf.mxu0
        %v1024 = vadd.f32 0.0, %v1023
        %v1025 = vpop.f32.mrf.mxu0
        %v1026 = vadd.f32 0.0, %v1025
        %1027 = vdwg.mxu0
        %v1028 = vadd.f32 %v442, %v989
        %v1029 = vadd.f32 %v443, %v991
        %v1030 = vadd.f32 %v444, %v994
        %v1031 = vadd.f32 %v445, %v996
        %v1032 = vadd.f32 %v446, %v999
        %v1033 = vadd.f32 %v447, %v1001
        %v1034 = vadd.f32 %v448, %v1004
        %v1035 = vadd.f32 %v449, %v1006
        %v1036 = vadd.f32 %v450, %v1009
        %v1037 = vadd.f32 %v451, %v1011
        %v1038 = vadd.f32 %v452, %v1014
        %v1039 = vadd.f32 %v453, %v1016
        %v1040 = vadd.f32 %v454, %v1019
        %v1041 = vadd.f32 %v455, %v1021
        %v1042 = vadd.f32 %v456, %v1024
        %v1043 = vadd.f32 %v457, %v1026
        %v1044 = vld [vmem:[%s6] sm:$0x1]
        %v1046 = vperm.slane %v1044, 0
        %v1048 = vadd.f32 %v1028, %v1046
        %v1049 = vadd.f32 %v1029, %v1046
        %v1050 = vadd.f32 %v1030, %v1046
        %v1051 = vadd.f32 %v1031, %v1046
        %v1052 = vadd.f32 %v1032, %v1046
        %v1053 = vadd.f32 %v1033, %v1046
        %v1054 = vadd.f32 %v1034, %v1046
        %v1055 = vadd.f32 %v1035, %v1046
        %v1056 = vadd.f32 %v1036, %v1046
        %v1057 = vadd.f32 %v1037, %v1046
        %v1058 = vadd.f32 %v1038, %v1046
        %v1059 = vadd.f32 %v1039, %v1046
        %v1060 = vadd.f32 %v1040, %v1046
        %v1061 = vadd.f32 %v1041, %v1046
        %v1062 = vadd.f32 %v1042, %v1046
        %v1063 = vadd.f32 %v1043, %v1046
        %v1064 = vmax.f32 %v1048, 0.0
        %v1065 = vmax.f32 %v1049, 0.0
        %v1066 = vmax.f32 %v1050, 0.0
        %v1067 = vmax.f32 %v1051, 0.0
        %v1068 = vmax.f32 %v1052, 0.0
        %v1069 = vmax.f32 %v1053, 0.0
        %v1070 = vmax.f32 %v1054, 0.0
        %v1071 = vmax.f32 %v1055, 0.0
        %v1072 = vmax.f32 %v1056, 0.0
        %v1073 = vmax.f32 %v1057, 0.0
        %v1074 = vmax.f32 %v1058, 0.0
        %v1075 = vmax.f32 %v1059, 0.0
        %v1076 = vmax.f32 %v1060, 0.0
        %v1077 = vmax.f32 %v1061, 0.0
        %v1078 = vmax.f32 %v1062, 0.0
        %v1079 = vmax.f32 %v1063, 0.0
        %1080 = vst.msk [vmem:[%s430] sm:$0xff] %vm954, %v1064
        %1081 = vst.msk [vmem:[%s430 + $0x8] sm:$0xff] %vm954, %v1065
        %1082 = vst.msk [vmem:[%s430 + $0x10] sm:$0xff] %vm954, %v1066
        %1083 = vst.msk [vmem:[%s430 + $0x18] sm:$0xff] %vm954, %v1067
        %1084 = vst.msk [vmem:[%s430 + $0x20] sm:$0xff] %vm954, %v1068
        %1085 = vst.msk [vmem:[%s430 + $0x28] sm:$0xff] %vm954, %v1069
        %1086 = vst.msk [vmem:[%s430 + $0x30] sm:$0xff] %vm954, %v1070
        %1087 = vst.msk [vmem:[%s430 + $0x38] sm:$0xff] %vm954, %v1071
        %1088 = vst.msk [vmem:[%s430 + $0x40] sm:$0xff] %vm954, %v1072
        %1089 = vst.msk [vmem:[%s430 + $0x48] sm:$0xff] %vm954, %v1073
        %1090 = vst.msk [vmem:[%s430 + $0x50] sm:$0xff] %vm954, %v1074
        %1091 = vst.msk [vmem:[%s430 + $0x58] sm:$0xff] %vm954, %v1075
        %1092 = vst.msk [vmem:[%s430 + $0x60] sm:$0xff] %vm954, %v1076
        %1093 = vst.msk [vmem:[%s430 + $0x68] sm:$0xff] %vm954, %v1077
        %1094 = vst.msk [vmem:[%s430 + $0x70] sm:$0xff] %vm954, %v1078
        %1095 = vst.msk [vmem:[%s430 + $0x78] sm:$0xff] %vm954, %v1079
        %s1096 = sand.u32 %s233, 1
        %s1097 = scalar_lea.sflag [#allocation4], %s1096
        %s1098 = sand.u32 %s233, 1
        %s1099 = smul.addr %s1098, 128
        %s1100 = scalar_lea.vmem [#allocation8], %s1099
        // Predicated region
        $region61: #{res_conv_forward.1} parent=47 // pred_check
          %p1101 = pneg %p243
        $region62: #{res_conv_forward.1} parent=47 // pred_check_branch
          %1103 = sbr.rel (%p1101) target = $region64
        $region63: #{res_conv_forward.1} parent=47 // pred_region
          %s1104 = smul.u32 8, %s32
          %1106 = vsyncadd %s1097, 0
          %s1107 = smul.addr %s1104, 2
          %s1108 = smul.addr %s31, 32
          %s1109 = sadd.s32 %s1107, %s1108
          %s1110 = smul.addr %s1109, 8
          %s1111 = scalar_lea.hbm %s7, %s1110
          %s1112 = sshll.u32 %s1100, 4
          %s1113 = int_to_ptr.vmem [resolvable:$true] %s1112
          %s1114 = sshll.u32 %s1111, 4
          %s1115 = int_to_ptr.hbm [resolvable:$true] %s1114
          %1120 = dma.vmem_to_hbm [thread:$0]  %s1113, 2048, %s1115, %s1097, 128, 128, 8
        $region64: #{res_conv_forward.1} parent=47 // pred_fallthru
          _
      $region48: #{res_conv_forward.1} parent=5 // pred_fallthru
        _
      %p1121 = scmp.le.s32.totalorder 2, %s22
      // Predicated region
      $region65: #{res_conv_forward.1} parent=5 // pred_check
        %p1122 = pneg %p1121
      $region66: #{res_conv_forward.1} parent=5 // pred_check_branch
        %1124 = sbr.rel (%p1122) target = $region68
      $region67: #{res_conv_forward.1} parent=5 // pred_region
        %s1125 = ssub.s32 %s22, 2
        // Predicated region
        $region69: #{res_conv_forward.1} parent=67 // pred_check
          %p1126 = pneg %p249
        $region70: #{res_conv_forward.1} parent=67 // pred_check_branch
          %1128 = sbr.rel (%p1126) target = $region72
        $region71: #{res_conv_forward.1} parent=67 // pred_region
          %s1129 = sand.u32 %s234, 1
          %s1130 = scalar_lea.sflag [#allocation4], %s1129
          %s1131 = sand.u32 %s234, 1
          %s1132 = smul.addr %s1131, 128
          %s1133 = scalar_lea.vmem [#allocation8], %s1132
          %1135 = dma.done %s1130, 2048
        $region72: #{res_conv_forward.1} parent=67 // pred_fallthru
          _
      $region68: #{res_conv_forward.1} parent=5 // pred_fallthru
        _
    $region6: #{res_conv_forward.1} parent=1 // loop_footer
      %s26 = sadd.s32 1, %s22
    $region7: #{res_conv_forward.1} parent=1 // loop_footer_branch
      %21 = sbr.rel target = $region3
    $region8: #{res_conv_forward.1} parent=1 // loop_exit
      _
    %1136 = vsyncpa [#allocation3], 1
    %s1137 = scalar_lea.sflag [#allocation3], 1
    %1138 = vsyncpa %s1137, 1
    %1139 = vsyncpa [#allocation6], 1
    %s1140 = scalar_lea.sflag [#allocation6], 1
    %1141 = vsyncpa %s1140, 1
    %1142 = vsyncpa [#allocation4], 1
    %s1143 = scalar_lea.sflag [#allocation4], 1
    %1144 = vsyncpa %s1143, 1

</llo_original>
